<compile_context>
chip_gen: v5e
topology: v5e:2x2
jax: 0.10.0
libtpu: 0.0.40
codegen_flags: <defaults>
</compile_context>

<pallas_src>
import jax
import jax.numpy as jnp
from jax.experimental import pallas as pl
from jax.experimental.pallas import tpu as pltpu


# ----------------------------------------------------------------------------
# Model hyper-params (mirroring the PyTorch script)
# ----------------------------------------------------------------------------
HIDDEN_SIZE = 64
INPUT_SIZE = 50

_TEXT = [
    'The movie was fantastic and very engaging',
    'I hated the acting and the storyline',
    'It was boring and lacked depth',
    'Amazing performance by the actors and great direction',
    'Not worth watching at all',
    'One of the best movies I have ever seen',
]
# vocab_size = len(word2vec_model.wv) -> number of unique lowercase tokens
_VOCAB = sorted({w for s in _TEXT for w in s.lower().split()})
VOCAB_SIZE = len(_VOCAB)

SUBLANE = 8     # f32 sublane tile
LANE = 128      # lane tile


# ----------------------------------------------------------------------------
# Pallas kernel: hoisted x-projection + unrolled LSTM recurrence + Linear head
# Gate order inside the kernel is (i, f, o, g) -- set up by prepare_weights().
# ----------------------------------------------------------------------------
def _make_lstm_fc_kernel(T, Bp, H):
    def kernel(x_ref, wih_ref, whh_ref, b_ref, wfc_ref, bfc_ref, out_ref):
        # x_ref   : (T*Bp, D)  bf16   time-major rows (t*Bp + b), batch padded
        # wih_ref : (D, 4H)    bf16   gate cols in (i, f, o, g) order
        # whh_ref : (H, 4H)    bf16   gate cols in (i, f, o, g) order
        # b_ref   : (1, 4H)    f32    bias_ih + bias_hh, (i, f, o, g) order
        # wfc_ref : (H, Vp)    bf16   fc.weight^T, lane-padded
        # bfc_ref : (1, Vp)    f32    fc.bias, lane-padded
        # out_ref : (Bp, Vp)   f32

        whh = whh_ref[...]                       # (H, 4H) bf16, loaded once
        bias = b_ref[...]                        # (1, 4H) f32

        # Hoisted input projection: one batched MXU matmul for all timesteps,
        # bias folded in once.  f32 accumulate.
        xw = jnp.dot(x_ref[...], wih_ref[...],
                     preferred_element_type=jnp.float32) + bias  # (T*Bp, 4H)

        # ---- t = 0: h == c == 0, so skip the recurrent matmul entirely.
        g0 = xw[0:Bp, :]                                          # (Bp, 4H)
        s0 = jax.nn.sigmoid(g0[:, :3 * H])       # one EUP push: i, f, o
        i_g = s0[:, 0 * H:1 * H]
        o_g = s0[:, 2 * H:3 * H]
        g_g = jnp.tanh(g0[:, 3 * H:4 * H])       # one EUP push: g
        c = i_g * g_g                            # f*c term vanishes (c==0)
        h = o_g * jnp.tanh(c)

        # ---- t = 1 .. T-1: fully unrolled; only h@W_hh stays serial.
        for t in range(1, T):
            gates = xw[t * Bp:(t + 1) * Bp, :] + jnp.dot(
                h.astype(whh.dtype), whh,
                preferred_element_type=jnp.float32)               # (Bp, 4H)
            s = jax.nn.sigmoid(gates[:, :3 * H])                  # i, f, o
            i_g = s[:, 0 * H:1 * H]
            f_g = s[:, 1 * H:2 * H]
            o_g = s[:, 2 * H:3 * H]
            g_g = jnp.tanh(gates[:, 3 * H:4 * H])
            c = f_g * c + i_g * g_g
            h = o_g * jnp.tanh(c)

        # fc(hidden[-1]) on the lane-padded output (unmasked full-tile store).
        out_ref[...] = (
            jnp.dot(h.astype(wfc_ref.dtype), wfc_ref[...],
                    preferred_element_type=jnp.float32)
            + bfc_ref[...]
        )

    return kernel


# ----------------------------------------------------------------------------
# One-time weight preparation ("model init"): layout, gate reorder, casts.
# ----------------------------------------------------------------------------
def prepare_weights(w_ih, w_hh, b_ih, b_hh, w_fc, b_fc):
    """PyTorch layouts in: w_ih (4H, D), w_hh (4H, H), b_ih/b_hh (4H,),
       w_fc (V, H), b_fc (V,).  Returns pre-laid-out kernel operands."""
    H = w_hh.shape[1]
    V = w_fc.shape[0]
    Vp = max(LANE, ((V + LANE - 1) // LANE) * LANE)

    def reorder_ifog(m):
        # PyTorch gate order along axis 0 is (i, f, g, o); kernel wants
        # (i, f, o, g) so sigmoid covers the first 3H columns contiguously.
        i, f, g, o = (m[0 * H:1 * H], m[1 * H:2 * H],
                      m[2 * H:3 * H], m[3 * H:4 * H])
        return jnp.concatenate([i, f, o, g], axis=0)

    wih_t = jnp.transpose(reorder_ifog(w_ih)).astype(jnp.bfloat16)   # (D, 4H)
    whh_t = jnp.transpose(reorder_ifog(w_hh)).astype(jnp.bfloat16)   # (H, 4H)
    b = reorder_ifog(b_ih + b_hh).reshape(1, 4 * H).astype(jnp.float32)
    wfc_t = (jnp.zeros((H, Vp), jnp.float32)
             .at[:, :V].set(jnp.transpose(w_fc).astype(jnp.float32))
             .astype(jnp.bfloat16))                                  # (H, Vp)
    bfc = (jnp.zeros((1, Vp), jnp.float32)
           .at[:, :V].set(b_fc.reshape(1, V).astype(jnp.float32)))   # (1, Vp)

    prepared = tuple(jax.block_until_ready(a) for a in
                     (wih_t, whh_t, b, wfc_t, bfc))
    return prepared, V, Vp


# ----------------------------------------------------------------------------
# Per-call forward: only x layout prep happens here.
# ----------------------------------------------------------------------------
def word_prediction_lstm(x, prepared, V):
    """x: (B, T, D) float32. `prepared` from prepare_weights()."""
    wih_t, whh_t, b, wfc_t, bfc = prepared
    B, T, D = x.shape
    H = whh_t.shape[0]
    Vp = wfc_t.shape[1]
    Bp = max(SUBLANE, ((B + SUBLANE - 1) // SUBLANE) * SUBLANE)

    # Pad batch to a full sublane tile, go time-major, cast to bf16 for MXU.
    # Padded rows compute harmless values and are sliced off below.
    xp = jnp.zeros((Bp, T, D), x.dtype).at[:B].set(x)
    x2d = jnp.transpose(xp, (1, 0, 2)).reshape(T * Bp, D).astype(jnp.bfloat16)

    out_padded = pl.pallas_call(
        _make_lstm_fc_kernel(T, Bp, H),
        out_shape=jax.ShapeDtypeStruct((Bp, Vp), jnp.float32),
        in_specs=[pl.BlockSpec(memory_space=pltpu.MemorySpace.VMEM)] * 6,
        out_specs=pl.BlockSpec(memory_space=pltpu.MemorySpace.VMEM),
    )(x2d, wih_t, whh_t, b, wfc_t, bfc)

    return out_padded[:B, :V]


# ----------------------------------------------------------------------------
# Pure-JAX float32 reference for a correctness check (PyTorch semantics).
# ----------------------------------------------------------------------------
def _reference(x, w_ih, w_hh, b_ih, b_hh, w_fc, b_fc):
    B, T, D = x.shape
    H = w_hh.shape[1]
    h = jnp.zeros((B, H), jnp.float32)
    c = jnp.zeros((B, H), jnp.float32)
    for t in range(T):
        gates = x[:, t, :] @ w_ih.T + b_ih + h @ w_hh.T + b_hh
        i_g = jax.nn.sigmoid(gates[:, 0 * H:1 * H])
        f_g = jax.nn.sigmoid(gates[:, 1 * H:2 * H])
        g_g = jnp.tanh(gates[:, 2 * H:3 * H])
        o_g = jax.nn.sigmoid(gates[:, 3 * H:4 * H])
        c = f_g * c + i_g * g_g
        h = o_g * jnp.tanh(c)
    return h @ w_fc.T + b_fc


if __name__ == "__main__":
    B, T, D, H, V = 2, 8, INPUT_SIZE, HIDDEN_SIZE, VOCAB_SIZE

    key = jax.random.PRNGKey(0)
    keys = jax.random.split(key, 8)
    bound = 1.0 / jnp.sqrt(jnp.float32(H))  # PyTorch default init range

    x = jax.random.normal(keys[0], (B, T, D), dtype=jnp.float32)
    w_ih = jax.random.uniform(keys[1], (4 * H, D), jnp.float32, -bound, bound)
    w_hh = jax.random.uniform(keys[2], (4 * H, H), jnp.float32, -bound, bound)
    b_ih = jax.random.uniform(keys[3], (4 * H,), jnp.float32, -bound, bound)
    b_hh = jax.random.uniform(keys[4], (4 * H,), jnp.float32, -bound, bound)
    w_fc = jax.random.uniform(keys[5], (V, H), jnp.float32, -bound, bound)
    b_fc = jax.random.uniform(keys[6], (V,), jnp.float32, -bound, bound)

    # One-time weight layout prep (hoisted out of the per-call path).
    prepared, V_out, _ = prepare_weights(w_ih, w_hh, b_ih, b_hh, w_fc, b_fc)

    out = word_prediction_lstm(x, prepared, V_out)
    out = jax.block_until_ready(out)

    ref = _reference(x, w_ih, w_hh, b_ih, b_hh, w_fc, b_fc)
    assert out.shape == (B, V), out.shape
    # bf16 MXU operands with f32 accumulation -> slightly looser tolerance
    # than a pure-f32 comparison.  Error grows with T; fine at T=8.
    assert jnp.allclose(out, ref, atol=2e-2, rtol=2e-2), "mismatch vs reference"

    print("KERNEL_OK")
</pallas_src>

<mosaic_0001>
module attributes {stable_mosaic.version = 11 : i64} {
  func.func @kernel(%arg0: memref<64x50xbf16, #tpu.memory_space<vmem>>, %arg1: memref<50x256xbf16, #tpu.memory_space<vmem>>, %arg2: memref<64x256xbf16, #tpu.memory_space<vmem>>, %arg3: memref<1x256xf32, #tpu.memory_space<vmem>>, %arg4: memref<64x128xbf16, #tpu.memory_space<vmem>>, %arg5: memref<1x128xf32, #tpu.memory_space<vmem>>, %arg6: memref<8x128xf32, #tpu.memory_space<vmem>>) attributes {dimension_semantics = [], scalar_prefetch = 0 : i64, scratch_operands = 0 : i64, tpu.core_type = #tpu.core_type<tc>} {
    %c0 = arith.constant 0 : index
    %c0_0 = arith.constant 0 : index
    %0 = vector.load %arg2[%c0, %c0_0] : memref<64x256xbf16, #tpu.memory_space<vmem>>, vector<64x256xbf16>
    %c0_1 = arith.constant 0 : index
    %c0_2 = arith.constant 0 : index
    %1 = vector.load %arg3[%c0_1, %c0_2] : memref<1x256xf32, #tpu.memory_space<vmem>>, vector<1x256xf32>
    %c0_3 = arith.constant 0 : index
    %c0_4 = arith.constant 0 : index
    %2 = vector.load %arg0[%c0_3, %c0_4] : memref<64x50xbf16, #tpu.memory_space<vmem>>, vector<64x50xbf16>
    %c0_5 = arith.constant 0 : index
    %c0_6 = arith.constant 0 : index
    %3 = vector.load %arg1[%c0_5, %c0_6] : memref<50x256xbf16, #tpu.memory_space<vmem>>, vector<50x256xbf16>
    %cst = arith.constant dense<0.000000e+00> : vector<64x256xf32>
    %4 = tpu.matmul %2, %3, %cst {dimension_numbers = #tpu.dot_dimension_numbers<[1], [0], [0], [1], [0, 0, 1, 1], [], []>} : vector<64x50xbf16>, vector<50x256xbf16>, vector<64x256xf32> -> vector<64x256xf32>
    %5 = vector.broadcast %1 : vector<1x256xf32> to vector<64x256xf32>
    %6 = arith.addf %4, %5 : vector<64x256xf32>
    %7 = vector.extract_strided_slice %6 {offsets = [0, 0], sizes = [8, 256], strides = [1, 1]} : vector<64x256xf32> to vector<8x256xf32>
    %8 = vector.extract_strided_slice %7 {offsets = [0, 0], sizes = [8, 192], strides = [1, 1]} : vector<8x256xf32> to vector<8x192xf32>
    %9 = arith.negf %8 : vector<8x192xf32>
    %10 = math.exp %9 : vector<8x192xf32>
    %cst_7 = arith.constant 1.000000e+00 : f32
    %11 = vector.broadcast %cst_7 : f32 to vector<8x192xf32>
    %12 = arith.addf %11, %10 : vector<8x192xf32>
    %13 = arith.divf %11, %12 : vector<8x192xf32>
    %14 = vector.extract_strided_slice %13 {offsets = [0, 0], sizes = [8, 64], strides = [1, 1]} : vector<8x192xf32> to vector<8x64xf32>
    %15 = vector.extract_strided_slice %13 {offsets = [0, 128], sizes = [8, 64], strides = [1, 1]} : vector<8x192xf32> to vector<8x64xf32>
    %16 = vector.extract_strided_slice %7 {offsets = [0, 192], sizes = [8, 64], strides = [1, 1]} : vector<8x256xf32> to vector<8x64xf32>
    %17 = math.tanh %16 : vector<8x64xf32>
    %18 = arith.mulf %14, %17 : vector<8x64xf32>
    %19 = math.tanh %18 : vector<8x64xf32>
    %20 = arith.mulf %15, %19 : vector<8x64xf32>
    %21 = vector.extract_strided_slice %6 {offsets = [8, 0], sizes = [8, 256], strides = [1, 1]} : vector<64x256xf32> to vector<8x256xf32>
    %22 = arith.truncf %20 : vector<8x64xf32> to vector<8x64xbf16>
    %cst_8 = arith.constant dense<0.000000e+00> : vector<8x256xf32>
    %23 = tpu.matmul %22, %0, %cst_8 {dimension_numbers = #tpu.dot_dimension_numbers<[1], [0], [0], [1], [0, 0, 1, 1], [], []>} : vector<8x64xbf16>, vector<64x256xbf16>, vector<8x256xf32> -> vector<8x256xf32>
    %24 = arith.addf %21, %23 : vector<8x256xf32>
    %25 = vector.extract_strided_slice %24 {offsets = [0, 0], sizes = [8, 192], strides = [1, 1]} : vector<8x256xf32> to vector<8x192xf32>
    %26 = arith.negf %25 : vector<8x192xf32>
    %27 = math.exp %26 : vector<8x192xf32>
    %cst_9 = arith.constant 1.000000e+00 : f32
    %28 = vector.broadcast %cst_9 : f32 to vector<8x192xf32>
    %29 = arith.addf %28, %27 : vector<8x192xf32>
    %30 = arith.divf %28, %29 : vector<8x192xf32>
    %31 = vector.extract_strided_slice %30 {offsets = [0, 0], sizes = [8, 64], strides = [1, 1]} : vector<8x192xf32> to vector<8x64xf32>
    %32 = vector.extract_strided_slice %30 {offsets = [0, 64], sizes = [8, 64], strides = [1, 1]} : vector<8x192xf32> to vector<8x64xf32>
    %33 = vector.extract_strided_slice %30 {offsets = [0, 128], sizes = [8, 64], strides = [1, 1]} : vector<8x192xf32> to vector<8x64xf32>
    %34 = vector.extract_strided_slice %24 {offsets = [0, 192], sizes = [8, 64], strides = [1, 1]} : vector<8x256xf32> to vector<8x64xf32>
    %35 = math.tanh %34 : vector<8x64xf32>
    %36 = arith.mulf %32, %18 : vector<8x64xf32>
    %37 = arith.mulf %31, %35 : vector<8x64xf32>
    %38 = arith.addf %36, %37 : vector<8x64xf32>
    %39 = math.tanh %38 : vector<8x64xf32>
    %40 = arith.mulf %33, %39 : vector<8x64xf32>
    %41 = vector.extract_strided_slice %6 {offsets = [16, 0], sizes = [8, 256], strides = [1, 1]} : vector<64x256xf32> to vector<8x256xf32>
    %42 = arith.truncf %40 : vector<8x64xf32> to vector<8x64xbf16>
    %cst_10 = arith.constant dense<0.000000e+00> : vector<8x256xf32>
    %43 = tpu.matmul %42, %0, %cst_10 {dimension_numbers = #tpu.dot_dimension_numbers<[1], [0], [0], [1], [0, 0, 1, 1], [], []>} : vector<8x64xbf16>, vector<64x256xbf16>, vector<8x256xf32> -> vector<8x256xf32>
    %44 = arith.addf %41, %43 : vector<8x256xf32>
    %45 = vector.extract_strided_slice %44 {offsets = [0, 0], sizes = [8, 192], strides = [1, 1]} : vector<8x256xf32> to vector<8x192xf32>
    %46 = arith.negf %45 : vector<8x192xf32>
    %47 = math.exp %46 : vector<8x192xf32>
    %cst_11 = arith.constant 1.000000e+00 : f32
    %48 = vector.broadcast %cst_11 : f32 to vector<8x192xf32>
    %49 = arith.addf %48, %47 : vector<8x192xf32>
    %50 = arith.divf %48, %49 : vector<8x192xf32>
    %51 = vector.extract_strided_slice %50 {offsets = [0, 0], sizes = [8, 64], strides = [1, 1]} : vector<8x192xf32> to vector<8x64xf32>
    %52 = vector.extract_strided_slice %50 {offsets = [0, 64], sizes = [8, 64], strides = [1, 1]} : vector<8x192xf32> to vector<8x64xf32>
    %53 = vector.extract_strided_slice %50 {offsets = [0, 128], sizes = [8, 64], strides = [1, 1]} : vector<8x192xf32> to vector<8x64xf32>
    %54 = vector.extract_strided_slice %44 {offsets = [0, 192], sizes = [8, 64], strides = [1, 1]} : vector<8x256xf32> to vector<8x64xf32>
    %55 = math.tanh %54 : vector<8x64xf32>
    %56 = arith.mulf %52, %38 : vector<8x64xf32>
    %57 = arith.mulf %51, %55 : vector<8x64xf32>
    %58 = arith.addf %56, %57 : vector<8x64xf32>
    %59 = math.tanh %58 : vector<8x64xf32>
    %60 = arith.mulf %53, %59 : vector<8x64xf32>
    %61 = vector.extract_strided_slice %6 {offsets = [24, 0], sizes = [8, 256], strides = [1, 1]} : vector<64x256xf32> to vector<8x256xf32>
    %62 = arith.truncf %60 : vector<8x64xf32> to vector<8x64xbf16>
    %cst_12 = arith.constant dense<0.000000e+00> : vector<8x256xf32>
    %63 = tpu.matmul %62, %0, %cst_12 {dimension_numbers = #tpu.dot_dimension_numbers<[1], [0], [0], [1], [0, 0, 1, 1], [], []>} : vector<8x64xbf16>, vector<64x256xbf16>, vector<8x256xf32> -> vector<8x256xf32>
    %64 = arith.addf %61, %63 : vector<8x256xf32>
    %65 = vector.extract_strided_slice %64 {offsets = [0, 0], sizes = [8, 192], strides = [1, 1]} : vector<8x256xf32> to vector<8x192xf32>
    %66 = arith.negf %65 : vector<8x192xf32>
    %67 = math.exp %66 : vector<8x192xf32>
    %cst_13 = arith.constant 1.000000e+00 : f32
    %68 = vector.broadcast %cst_13 : f32 to vector<8x192xf32>
    %69 = arith.addf %68, %67 : vector<8x192xf32>
    %70 = arith.divf %68, %69 : vector<8x192xf32>
    %71 = vector.extract_strided_slice %70 {offsets = [0, 0], sizes = [8, 64], strides = [1, 1]} : vector<8x192xf32> to vector<8x64xf32>
    %72 = vector.extract_strided_slice %70 {offsets = [0, 64], sizes = [8, 64], strides = [1, 1]} : vector<8x192xf32> to vector<8x64xf32>
    %73 = vector.extract_strided_slice %70 {offsets = [0, 128], sizes = [8, 64], strides = [1, 1]} : vector<8x192xf32> to vector<8x64xf32>
    %74 = vector.extract_strided_slice %64 {offsets = [0, 192], sizes = [8, 64], strides = [1, 1]} : vector<8x256xf32> to vector<8x64xf32>
    %75 = math.tanh %74 : vector<8x64xf32>
    %76 = arith.mulf %72, %58 : vector<8x64xf32>
    %77 = arith.mulf %71, %75 : vector<8x64xf32>
    %78 = arith.addf %76, %77 : vector<8x64xf32>
    %79 = math.tanh %78 : vector<8x64xf32>
    %80 = arith.mulf %73, %79 : vector<8x64xf32>
    %81 = vector.extract_strided_slice %6 {offsets = [32, 0], sizes = [8, 256], strides = [1, 1]} : vector<64x256xf32> to vector<8x256xf32>
    %82 = arith.truncf %80 : vector<8x64xf32> to vector<8x64xbf16>
    %cst_14 = arith.constant dense<0.000000e+00> : vector<8x256xf32>
    %83 = tpu.matmul %82, %0, %cst_14 {dimension_numbers = #tpu.dot_dimension_numbers<[1], [0], [0], [1], [0, 0, 1, 1], [], []>} : vector<8x64xbf16>, vector<64x256xbf16>, vector<8x256xf32> -> vector<8x256xf32>
    %84 = arith.addf %81, %83 : vector<8x256xf32>
    %85 = vector.extract_strided_slice %84 {offsets = [0, 0], sizes = [8, 192], strides = [1, 1]} : vector<8x256xf32> to vector<8x192xf32>
    %86 = arith.negf %85 : vector<8x192xf32>
    %87 = math.exp %86 : vector<8x192xf32>
    %cst_15 = arith.constant 1.000000e+00 : f32
    %88 = vector.broadcast %cst_15 : f32 to vector<8x192xf32>
    %89 = arith.addf %88, %87 : vector<8x192xf32>
    %90 = arith.divf %88, %89 : vector<8x192xf32>
    %91 = vector.extract_strided_slice %90 {offsets = [0, 0], sizes = [8, 64], strides = [1, 1]} : vector<8x192xf32> to vector<8x64xf32>
    %92 = vector.extract_strided_slice %90 {offsets = [0, 64], sizes = [8, 64], strides = [1, 1]} : vector<8x192xf32> to vector<8x64xf32>
    %93 = vector.extract_strided_slice %90 {offsets = [0, 128], sizes = [8, 64], strides = [1, 1]} : vector<8x192xf32> to vector<8x64xf32>
    %94 = vector.extract_strided_slice %84 {offsets = [0, 192], sizes = [8, 64], strides = [1, 1]} : vector<8x256xf32> to vector<8x64xf32>
    %95 = math.tanh %94 : vector<8x64xf32>
    %96 = arith.mulf %92, %78 : vector<8x64xf32>
    %97 = arith.mulf %91, %95 : vector<8x64xf32>
    %98 = arith.addf %96, %97 : vector<8x64xf32>
    %99 = math.tanh %98 : vector<8x64xf32>
    %100 = arith.mulf %93, %99 : vector<8x64xf32>
    %101 = vector.extract_strided_slice %6 {offsets = [40, 0], sizes = [8, 256], strides = [1, 1]} : vector<64x256xf32> to vector<8x256xf32>
    %102 = arith.truncf %100 : vector<8x64xf32> to vector<8x64xbf16>
    %cst_16 = arith.constant dense<0.000000e+00> : vector<8x256xf32>
    %103 = tpu.matmul %102, %0, %cst_16 {dimension_numbers = #tpu.dot_dimension_numbers<[1], [0], [0], [1], [0, 0, 1, 1], [], []>} : vector<8x64xbf16>, vector<64x256xbf16>, vector<8x256xf32> -> vector<8x256xf32>
    %104 = arith.addf %101, %103 : vector<8x256xf32>
    %105 = vector.extract_strided_slice %104 {offsets = [0, 0], sizes = [8, 192], strides = [1, 1]} : vector<8x256xf32> to vector<8x192xf32>
    %106 = arith.negf %105 : vector<8x192xf32>
    %107 = math.exp %106 : vector<8x192xf32>
    %cst_17 = arith.constant 1.000000e+00 : f32
    %108 = vector.broadcast %cst_17 : f32 to vector<8x192xf32>
    %109 = arith.addf %108, %107 : vector<8x192xf32>
    %110 = arith.divf %108, %109 : vector<8x192xf32>
    %111 = vector.extract_strided_slice %110 {offsets = [0, 0], sizes = [8, 64], strides = [1, 1]} : vector<8x192xf32> to vector<8x64xf32>
    %112 = vector.extract_strided_slice %110 {offsets = [0, 64], sizes = [8, 64], strides = [1, 1]} : vector<8x192xf32> to vector<8x64xf32>
    %113 = vector.extract_strided_slice %110 {offsets = [0, 128], sizes = [8, 64], strides = [1, 1]} : vector<8x192xf32> to vector<8x64xf32>
    %114 = vector.extract_strided_slice %104 {offsets = [0, 192], sizes = [8, 64], strides = [1, 1]} : vector<8x256xf32> to vector<8x64xf32>
    %115 = math.tanh %114 : vector<8x64xf32>
    %116 = arith.mulf %112, %98 : vector<8x64xf32>
    %117 = arith.mulf %111, %115 : vector<8x64xf32>
    %118 = arith.addf %116, %117 : vector<8x64xf32>
    %119 = math.tanh %118 : vector<8x64xf32>
    %120 = arith.mulf %113, %119 : vector<8x64xf32>
    %121 = vector.extract_strided_slice %6 {offsets = [48, 0], sizes = [8, 256], strides = [1, 1]} : vector<64x256xf32> to vector<8x256xf32>
    %122 = arith.truncf %120 : vector<8x64xf32> to vector<8x64xbf16>
    %cst_18 = arith.constant dense<0.000000e+00> : vector<8x256xf32>
    %123 = tpu.matmul %122, %0, %cst_18 {dimension_numbers = #tpu.dot_dimension_numbers<[1], [0], [0], [1], [0, 0, 1, 1], [], []>} : vector<8x64xbf16>, vector<64x256xbf16>, vector<8x256xf32> -> vector<8x256xf32>
    %124 = arith.addf %121, %123 : vector<8x256xf32>
    %125 = vector.extract_strided_slice %124 {offsets = [0, 0], sizes = [8, 192], strides = [1, 1]} : vector<8x256xf32> to vector<8x192xf32>
    %126 = arith.negf %125 : vector<8x192xf32>
    %127 = math.exp %126 : vector<8x192xf32>
    %cst_19 = arith.constant 1.000000e+00 : f32
    %128 = vector.broadcast %cst_19 : f32 to vector<8x192xf32>
    %129 = arith.addf %128, %127 : vector<8x192xf32>
    %130 = arith.divf %128, %129 : vector<8x192xf32>
    %131 = vector.extract_strided_slice %130 {offsets = [0, 0], sizes = [8, 64], strides = [1, 1]} : vector<8x192xf32> to vector<8x64xf32>
    %132 = vector.extract_strided_slice %130 {offsets = [0, 64], sizes = [8, 64], strides = [1, 1]} : vector<8x192xf32> to vector<8x64xf32>
    %133 = vector.extract_strided_slice %130 {offsets = [0, 128], sizes = [8, 64], strides = [1, 1]} : vector<8x192xf32> to vector<8x64xf32>
    %134 = vector.extract_strided_slice %124 {offsets = [0, 192], sizes = [8, 64], strides = [1, 1]} : vector<8x256xf32> to vector<8x64xf32>
    %135 = math.tanh %134 : vector<8x64xf32>
    %136 = arith.mulf %132, %118 : vector<8x64xf32>
    %137 = arith.mulf %131, %135 : vector<8x64xf32>
    %138 = arith.addf %136, %137 : vector<8x64xf32>
    %139 = math.tanh %138 : vector<8x64xf32>
    %140 = arith.mulf %133, %139 : vector<8x64xf32>
    %141 = vector.extract_strided_slice %6 {offsets = [56, 0], sizes = [8, 256], strides = [1, 1]} : vector<64x256xf32> to vector<8x256xf32>
    %142 = arith.truncf %140 : vector<8x64xf32> to vector<8x64xbf16>
    %cst_20 = arith.constant dense<0.000000e+00> : vector<8x256xf32>
    %143 = tpu.matmul %142, %0, %cst_20 {dimension_numbers = #tpu.dot_dimension_numbers<[1], [0], [0], [1], [0, 0, 1, 1], [], []>} : vector<8x64xbf16>, vector<64x256xbf16>, vector<8x256xf32> -> vector<8x256xf32>
    %144 = arith.addf %141, %143 : vector<8x256xf32>
    %145 = vector.extract_strided_slice %144 {offsets = [0, 0], sizes = [8, 192], strides = [1, 1]} : vector<8x256xf32> to vector<8x192xf32>
    %146 = arith.negf %145 : vector<8x192xf32>
    %147 = math.exp %146 : vector<8x192xf32>
    %cst_21 = arith.constant 1.000000e+00 : f32
    %148 = vector.broadcast %cst_21 : f32 to vector<8x192xf32>
    %149 = arith.addf %148, %147 : vector<8x192xf32>
    %150 = arith.divf %148, %149 : vector<8x192xf32>
    %151 = vector.extract_strided_slice %150 {offsets = [0, 0], sizes = [8, 64], strides = [1, 1]} : vector<8x192xf32> to vector<8x64xf32>
    %152 = vector.extract_strided_slice %150 {offsets = [0, 64], sizes = [8, 64], strides = [1, 1]} : vector<8x192xf32> to vector<8x64xf32>
    %153 = vector.extract_strided_slice %150 {offsets = [0, 128], sizes = [8, 64], strides = [1, 1]} : vector<8x192xf32> to vector<8x64xf32>
    %154 = vector.extract_strided_slice %144 {offsets = [0, 192], sizes = [8, 64], strides = [1, 1]} : vector<8x256xf32> to vector<8x64xf32>
    %155 = math.tanh %154 : vector<8x64xf32>
    %156 = arith.mulf %152, %138 : vector<8x64xf32>
    %157 = arith.mulf %151, %155 : vector<8x64xf32>
    %158 = arith.addf %156, %157 : vector<8x64xf32>
    %159 = math.tanh %158 : vector<8x64xf32>
    %160 = arith.mulf %153, %159 : vector<8x64xf32>
    %161 = arith.truncf %160 : vector<8x64xf32> to vector<8x64xbf16>
    %c0_22 = arith.constant 0 : index
    %c0_23 = arith.constant 0 : index
    %162 = vector.load %arg4[%c0_22, %c0_23] : memref<64x128xbf16, #tpu.memory_space<vmem>>, vector<64x128xbf16>
    %cst_24 = arith.constant dense<0.000000e+00> : vector<8x128xf32>
    %163 = tpu.matmul %161, %162, %cst_24 {dimension_numbers = #tpu.dot_dimension_numbers<[1], [0], [0], [1], [0, 0, 1, 1], [], []>} : vector<8x64xbf16>, vector<64x128xbf16>, vector<8x128xf32> -> vector<8x128xf32>
    %c0_25 = arith.constant 0 : index
    %c0_26 = arith.constant 0 : index
    %164 = vector.load %arg5[%c0_25, %c0_26] : memref<1x128xf32, #tpu.memory_space<vmem>>, vector<1x128xf32>
    %165 = vector.broadcast %164 : vector<1x128xf32> to vector<8x128xf32>
    %166 = arith.addf %163, %165 : vector<8x128xf32>
    %c0_27 = arith.constant 0 : index
    %c0_28 = arith.constant 0 : index
    %167 = vector.load %arg6[%c0_27, %c0_28] : memref<8x128xf32, #tpu.memory_space<vmem>>, vector<8x128xf32>
    tpu.vector_store %arg6[%c0_27, %c0_28], %166 {strides = array<i32>} : memref<8x128xf32, #tpu.memory_space<vmem>>, vector<8x128xf32>,
    return
  }
}

</mosaic_0001>

<llo_original>
// kernel: tpu_custom_call.1
$region0: #{tpu_custom_call.1}
  #allocation0 [shape = 'u32[]', space=smem, size = 0x4, offset = 0x4, fixed_abs, tag = 'smem constant byte address 0x4 - core index']
  #allocation1 [shape = 'u32[72,128]{1,0:T(1,128)}', space=vmem, size = 0x9000, scoped, tag = 'internal scratch']
  %s0 = inlined_call_operand.vmem [shape: bf16[64,50], index: 0, kind: input, shape index: {}]
  %s1 = inlined_call_operand.vmem [shape: bf16[50,256], index: 1, kind: input, shape index: {}]
  %s2 = inlined_call_operand.hbm [shape: bf16[64,256], index: 2, kind: input, shape index: {}]
  %s3 = inlined_call_operand.vmem [shape: f32[1,256], index: 3, kind: input, shape index: {}]
  %s4 = inlined_call_operand.hbm [shape: bf16[64,128], index: 4, kind: input, shape index: {}]
  %s5 = inlined_call_operand.vmem [shape: f32[1,128], index: 5, kind: input, shape index: {}]
  %s6 = inlined_call_operand.hbm [shape: f32[8,128], index: 6, kind: output, shape index: {}]
  %s7 = sld [smem:[#allocation0]]
  $region42: #{tpu_custom_call.1} parent=0
    _
  %s9 = ssub.s32 1, %s7
  %s10 = scalar_select 0, %s9, %s7
  $region1: #{tpu_custom_call.1} parent=0
    #allocation2 [shape = 'u8[32768]{0}', space=vmem, size = 0x8000, scoped, tag = 'input window, operand 2, single buffered']
    #allocation3 [shape = 's32[1]{0}', space=sflag, size = 0x4, scoped, tag = 'scoped memory for tpu_custom_call.1']
    #allocation4 [shape = 's32[1]{0}', space=sflag, size = 0x4, scoped, tag = 'scoped memory for tpu_custom_call.1']
    #allocation5 [shape = 'u8[16384]{0}', space=vmem, size = 0x4000, scoped, tag = 'input window, operand 4, single buffered']
    #allocation6 [shape = 's32[1]{0}', space=sflag, size = 0x4, scoped, tag = 'scoped memory for tpu_custom_call.1']
    #allocation7 [shape = 'u8[4096]{0}', space=vmem, size = 0x1000, scoped, tag = 'output window, operand 0, single buffered']
    %11 = vsyncpa [#allocation3], 0
    %12 = vsyncpa [#allocation6], 0
    %13 = vsyncpa [#allocation4], 0
    // Predicated region
    $region2: #{tpu_custom_call.1} parent=1 // pred_check
      _
    $region3: #{tpu_custom_call.1} parent=1 // pred_check_branch
      %15 = sbr.rel (0) target = $region5
    $region4: #{tpu_custom_call.1} parent=1 // pred_region
      _
    $region5: #{tpu_custom_call.1} parent=1 // pred_fallthru
      _
    // Predicated region
    $region6: #{tpu_custom_call.1} parent=1 // pred_check
      _
    $region7: #{tpu_custom_call.1} parent=1 // pred_check_branch
      %17 = sbr.rel (0) target = $region9
    $region8: #{tpu_custom_call.1} parent=1 // pred_region
      _
    $region9: #{tpu_custom_call.1} parent=1 // pred_fallthru
      _
    // Predicated region
    $region10: #{tpu_custom_call.1} parent=1 // pred_check
      _
    $region11: #{tpu_custom_call.1} parent=1 // pred_check_branch
      %19 = sbr.rel (0) target = $region13
    $region12: #{tpu_custom_call.1} parent=1 // pred_region
      %21 = vsyncadd [#allocation3], 0
      %s22 = sshll.u32 %s2, 4
      %s23 = int_to_ptr.hbm [resolvable:$true] %s22
      %s24 = sshll.u32 [#allocation2], 4
      %s25 = int_to_ptr.vmem [resolvable:$true] %s24
      %30 = dma.hbm_to_vmem [thread:$0]  %s23, 1024, %s25, [#allocation3], 128, 128, 8
    $region13: #{tpu_custom_call.1} parent=1 // pred_fallthru
      _
    // Predicated region
    $region14: #{tpu_custom_call.1} parent=1 // pred_check
      _
    $region15: #{tpu_custom_call.1} parent=1 // pred_check_branch
      %32 = sbr.rel (0) target = $region17
    $region16: #{tpu_custom_call.1} parent=1 // pred_region
      _
    $region17: #{tpu_custom_call.1} parent=1 // pred_fallthru
      _
    // Predicated region
    $region18: #{tpu_custom_call.1} parent=1 // pred_check
      _
    $region19: #{tpu_custom_call.1} parent=1 // pred_check_branch
      %34 = sbr.rel (0) target = $region21
    $region20: #{tpu_custom_call.1} parent=1 // pred_region
      %36 = vsyncadd [#allocation6], 0
      %s37 = sshll.u32 %s4, 4
      %s38 = int_to_ptr.hbm [resolvable:$true] %s37
      %s39 = sshll.u32 [#allocation5], 4
      %s40 = int_to_ptr.vmem [resolvable:$true] %s39
      %45 = dma.hbm_to_vmem [thread:$0]  %s38, 512, %s40, [#allocation6], 64, 64, 4
    $region21: #{tpu_custom_call.1} parent=1 // pred_fallthru
      _
    // Predicated region
    $region22: #{tpu_custom_call.1} parent=1 // pred_check
      _
    $region23: #{tpu_custom_call.1} parent=1 // pred_check_branch
      %47 = sbr.rel (0) target = $region25
    $region24: #{tpu_custom_call.1} parent=1 // pred_region
      _
    $region25: #{tpu_custom_call.1} parent=1 // pred_fallthru
      _
    // Predicated region
    $region26: #{tpu_custom_call.1} parent=1 // pred_check
      _
    $region27: #{tpu_custom_call.1} parent=1 // pred_check_branch
      %49 = sbr.rel (0) target = $region29
    $region28: #{tpu_custom_call.1} parent=1 // pred_region
      %51 = dma.done [#allocation3], 1024
    $region29: #{tpu_custom_call.1} parent=1 // pred_fallthru
      _
    // Predicated region
    $region30: #{tpu_custom_call.1} parent=1 // pred_check
      _
    $region31: #{tpu_custom_call.1} parent=1 // pred_check_branch
      %53 = sbr.rel (0) target = $region33
    $region32: #{tpu_custom_call.1} parent=1 // pred_region
      %55 = dma.done [#allocation6], 512
    $region33: #{tpu_custom_call.1} parent=1 // pred_fallthru
      _
    %v57 = vld [vmem:[#allocation2] sm:$0xff]
    %v58 = vld [vmem:[#allocation2 + $0x8] sm:$0xff]
    %v59 = vld [vmem:[#allocation2 + $0x10] sm:$0xff]
    %v60 = vld [vmem:[#allocation2 + $0x18] sm:$0xff]
    %v61 = vld [vmem:[#allocation2 + $0x20] sm:$0xff]
    %v62 = vld [vmem:[#allocation2 + $0x28] sm:$0xff]
    %v63 = vld [vmem:[#allocation2 + $0x30] sm:$0xff]
    %v64 = vld [vmem:[#allocation2 + $0x38] sm:$0xff]
    %v65 = vld [vmem:[%s3] sm:$0x3]
    %v66 = vld [vmem:[%s0] sm:$0xf]
    %v67 = vld [vmem:[%s0 + $0x4] sm:$0xf]
    %v68 = vld [vmem:[%s0 + $0x8] sm:$0xf]
    %v69 = vld [vmem:[%s0 + $0xc] sm:$0xf]
    %v70 = vld [vmem:[%s0 + $0x10] sm:$0xf]
    %v71 = vld [vmem:[%s0 + $0x14] sm:$0xf]
    %v72 = vld [vmem:[%s0 + $0x18] sm:$0xf]
    %v73 = vld [vmem:[%s0 + $0x1c] sm:$0xf]
    %v74 = vld [vmem:[%s1] sm:$0xff]
    %v75 = vld [vmem:[%s1 + $0x8] sm:$0xff]
    %v76 = vld [vmem:[%s1 + $0x10] sm:$0xff]
    %v77 = vld [vmem:[%s1 + $0x18] sm:$0xff]
    %v78 = vld [vmem:[%s1 + $0x20] sm:$0xff]
    %v79 = vld [vmem:[%s1 + $0x28] sm:$0xff]
    %v80 = vld [vmem:[%s1 + $0x30] sm:$0x11]
    %v82 = vperm.slane %v65, 0
    %v83 = vperm.slane %v65, 1
    %v94 = vunpack.c.l.b16 %v66
    %v95 = vunpack.c.l.b16 %v67
    %v96 = vunpack.c.l.b16 %v68
    %v97 = vunpack.c.l.b16 %v69
    %v98 = vunpack.c.l.b16 %v70
    %v99 = vunpack.c.l.b16 %v71
    %v100 = vunpack.c.l.b16 %v72
    %v101 = vunpack.c.l.b16 %v73
    %v102 = vpack.c.b16 %v95, %v94
    %v103 = vpack.c.b16 %v97, %v96
    %v104 = vpack.c.b16 %v99, %v98
    %v105 = vpack.c.b16 %v101, %v100
    %v113 = vunpack.c.l.b16 %v74
    %v114 = vunpack.c.h.b16 %v74
    %v115 = vunpack.c.l.b16 %v75
    %v116 = vunpack.c.h.b16 %v75
    %v117 = vunpack.c.l.b16 %v76
    %v118 = vunpack.c.h.b16 %v76
    %v119 = vunpack.c.l.b16 %v77
    %v120 = vunpack.c.h.b16 %v77
    %v121 = vunpack.c.l.b16 %v78
    %v122 = vunpack.c.h.b16 %v78
    %v123 = vunpack.c.l.b16 %v79
    %v124 = vunpack.c.h.b16 %v79
    %v125 = vunpack.c.l.b16 %v80
    %v126 = vunpack.c.h.b16 %v80
    %v127 = vpack.c.b16 %v115, %v113
    %v128 = vpack.c.b16 %v116, %v114
    %v129 = vpack.c.b16 %v119, %v117
    %v130 = vpack.c.b16 %v120, %v118
    %v131 = vpack.c.b16 %v123, %v121
    %v132 = vpack.c.b16 %v124, %v122
    %v133 = vpack.c.b16 %v125, %v125
    %v134 = vpack.c.b16 %v126, %v126
    %vm141 = vcmask 408576
    %v143 = vsel %vm141, %v102, 0
    %v146 = vsel %vm141, %v103, 0
    %v149 = vsel %vm141, %v104, 0
    %v152 = vsel %vm141, %v105, 0
    %vm154 = vcmask 1040384
    %v156 = vsel %vm154, %v133, 0
    %v159 = vsel %vm154, %v134, 0
    %161 = vmatpush.bf16.msra.mxu0 0
    %162 = vmatpush.bf16.msra.mxu0 0
    %163 = vmatpush.bf16.msra.mxu0 0
    %164 = vmatpush.bf16.msra.mxu0 0
    %165 = vmatpush.bf16.msra.mxu0 %v156
    %166 = vmatpush.bf16.msra.mxu0 %v131
    %167 = vmatpush.bf16.msra.mxu0 %v129
    %168 = vmatpush.bf16.msra.mxu0 %v127
    %169 = vmatmul.bf16.gmra.mxu0 %v143
    %v170 = vpop.f32.mrf.mxu0
    %v171 = vadd.f32 %v82, %v170
    %v172 = vpop.f32.mrf.mxu0
    %v173 = vadd.f32 %v82, %v172
    %174 = vmatmul.bf16.gmra.mxu0 %v146
    %v175 = vpop.f32.mrf.mxu0
    %v176 = vadd.f32 %v82, %v175
    %v177 = vpop.f32.mrf.mxu0
    %v178 = vadd.f32 %v82, %v177
    %179 = vmatmul.bf16.gmra.mxu0 %v149
    %v180 = vpop.f32.mrf.mxu0
    %v181 = vadd.f32 %v82, %v180
    %v182 = vpop.f32.mrf.mxu0
    %v183 = vadd.f32 %v82, %v182
    %184 = vmatmul.bf16.gmra.mxu0 %v152
    %v185 = vpop.f32.mrf.mxu0
    %v186 = vadd.f32 %v82, %v185
    %v187 = vpop.f32.mrf.mxu0
    %v188 = vadd.f32 %v82, %v187
    %189 = vdwg.mxu0
    %190 = vmatpush.bf16.msra.mxu0 0
    %191 = vmatpush.bf16.msra.mxu0 0
    %192 = vmatpush.bf16.msra.mxu0 0
    %193 = vmatpush.bf16.msra.mxu0 0
    %194 = vmatpush.bf16.msra.mxu0 %v159
    %195 = vmatpush.bf16.msra.mxu0 %v132
    %196 = vmatpush.bf16.msra.mxu0 %v130
    %197 = vmatpush.bf16.msra.mxu0 %v128
    %198 = vmatmul.bf16.gmra.mxu0 %v143
    %v199 = vpop.f32.mrf.mxu0
    %v200 = vadd.f32 %v83, %v199
    %v201 = vpop.f32.mrf.mxu0
    %v202 = vadd.f32 %v83, %v201
    %203 = vmatmul.bf16.gmra.mxu0 %v146
    %v204 = vpop.f32.mrf.mxu0
    %v205 = vadd.f32 %v83, %v204
    %v206 = vpop.f32.mrf.mxu0
    %v207 = vadd.f32 %v83, %v206
    %208 = vmatmul.bf16.gmra.mxu0 %v149
    %v209 = vpop.f32.mrf.mxu0
    %v210 = vadd.f32 %v83, %v209
    %v211 = vpop.f32.mrf.mxu0
    %v212 = vadd.f32 %v83, %v211
    %213 = vmatmul.bf16.gmra.mxu0 %v152
    %v214 = vpop.f32.mrf.mxu0
    %v215 = vadd.f32 %v83, %v214
    %v216 = vpop.f32.mrf.mxu0
    %v217 = vadd.f32 %v83, %v216
    %218 = vdwg.mxu0
    %v219 = vxor.u32 %v171, 2147483648
    %v220 = vxor.u32 %v200, 2147483648
    %v221 = vmul.f32 %v219, 1.442695
    %v222 = vpow.pop %v221
    %v223 = vmul.f32 %v220, 1.442695
    %v224 = vpow.pop %v223
    %v225 = vadd.f32 %v222, 1.0
    %v226 = vadd.f32 %v224, 1.0
    %v227 = vrcp.pop %v225
    %v228 = vmul.f32 %v225, %v227
    %v229 = vsub.f32 1.0, %v228
    %v230 = vmul.f32 %v227, %v229
    %v231 = vadd.f32 %v227, %v230
    %vm232 = vweird.f32 %v225
    %vm233 = vweird.f32 %v227
    %vm234 = vmor %vm232, %vm233
    %v235 = vsel %vm234, %v227, %v231
    %v236 = vand.u32 2147483647, %v225
    %vm237 = vcmp.eq.f32.partialorder %v236, 8.507059e+37
    %v238 = vand.u32 %v225, 2147483648
    %v239 = vor.u32 1.1754944e-38, %v238
    %v240 = vsel %vm237, %v239, %v235
    %v241 = vmul.f32 1.0, %v240
    %v242 = vrcp.pop %v226
    %v243 = vmul.f32 %v226, %v242
    %v244 = vsub.f32 1.0, %v243
    %v245 = vmul.f32 %v242, %v244
    %v246 = vadd.f32 %v242, %v245
    %vm247 = vweird.f32 %v226
    %vm248 = vweird.f32 %v242
    %vm249 = vmor %vm247, %vm248
    %v250 = vsel %vm249, %v242, %v246
    %v251 = vand.u32 2147483647, %v226
    %vm252 = vcmp.eq.f32.partialorder %v251, 8.507059e+37
    %v253 = vand.u32 %v226, 2147483648
    %v254 = vor.u32 1.1754944e-38, %v253
    %v255 = vsel %vm252, %v254, %v250
    %v256 = vmul.f32 1.0, %v255
    %v257 = vtanh.pop %v200
    %259 = vrot.lane.b32.xlu0 %v257, 64
    %v260 = vpop.permute.xlu0 %259
    %v262 = vmul.f32 %v241, %v260
    %v263 = vtanh.pop %v262
    %v264 = vmul.f32 %v256, %v263
    %v265 = vpack.c.bf16 %v264, %v264
    %v274 = vunpack.c.l.b16 %v57
    %v275 = vunpack.c.h.b16 %v57
    %v276 = vunpack.c.l.b16 %v58
    %v277 = vunpack.c.h.b16 %v58
    %v278 = vunpack.c.l.b16 %v59
    %v279 = vunpack.c.h.b16 %v59
    %v280 = vunpack.c.l.b16 %v60
    %v281 = vunpack.c.h.b16 %v60
    %v282 = vunpack.c.l.b16 %v61
    %v283 = vunpack.c.h.b16 %v61
    %v284 = vunpack.c.l.b16 %v62
    %v285 = vunpack.c.h.b16 %v62
    %v286 = vunpack.c.l.b16 %v63
    %v287 = vunpack.c.h.b16 %v63
    %v288 = vunpack.c.l.b16 %v64
    %v289 = vunpack.c.h.b16 %v64
    %v290 = vpack.c.b16 %v276, %v274
    %v291 = vpack.c.b16 %v277, %v275
    %v292 = vpack.c.b16 %v280, %v278
    %v293 = vpack.c.b16 %v281, %v279
    %v294 = vpack.c.b16 %v284, %v282
    %v295 = vpack.c.b16 %v285, %v283
    %v296 = vpack.c.b16 %v288, %v286
    %v297 = vpack.c.b16 %v289, %v287
    %vm306 = vcmask 523264
    %v308 = vsel %vm306, %v265, 0
    %310 = vmatpush.bf16.msra.mxu0 0
    %311 = vmatpush.bf16.msra.mxu0 0
    %312 = vmatpush.bf16.msra.mxu0 0
    %313 = vmatpush.bf16.msra.mxu0 0
    %314 = vmatpush.bf16.msra.mxu0 %v296
    %315 = vmatpush.bf16.msra.mxu0 %v294
    %316 = vmatpush.bf16.msra.mxu0 %v292
    %317 = vmatpush.bf16.msra.mxu0 %v290
    %318 = vmatmul.bf16.gmra.mxu0 %v308
    %v319 = vpop.f32.mrf.mxu0
    %v320 = vadd.f32 0.0, %v319
    %v321 = vpop.f32.mrf.mxu0
    %322 = vdwg.mxu0
    %323 = vmatpush.bf16.msra.mxu0 0
    %324 = vmatpush.bf16.msra.mxu0 0
    %325 = vmatpush.bf16.msra.mxu0 0
    %326 = vmatpush.bf16.msra.mxu0 0
    %327 = vmatpush.bf16.msra.mxu0 %v297
    %328 = vmatpush.bf16.msra.mxu0 %v295
    %329 = vmatpush.bf16.msra.mxu0 %v293
    %330 = vmatpush.bf16.msra.mxu0 %v291
    %331 = vmatmul.bf16.gmra.mxu0 %v308
    %v332 = vpop.f32.mrf.mxu0
    %v333 = vadd.f32 0.0, %v332
    %v334 = vpop.f32.mrf.mxu0
    %335 = vdwg.mxu0
    %v336 = vadd.f32 %v173, %v320
    %v337 = vadd.f32 %v202, %v333
    %v338 = vxor.u32 %v336, 2147483648
    %v339 = vxor.u32 %v337, 2147483648
    %v340 = vmul.f32 %v338, 1.442695
    %v341 = vpow.pop %v340
    %v342 = vmul.f32 %v339, 1.442695
    %v343 = vpow.pop %v342
    %v344 = vadd.f32 %v341, 1.0
    %v345 = vadd.f32 %v343, 1.0
    %v346 = vrcp.pop %v344
    %v347 = vmul.f32 %v344, %v346
    %v348 = vsub.f32 1.0, %v347
    %v349 = vmul.f32 %v346, %v348
    %v350 = vadd.f32 %v346, %v349
    %vm351 = vweird.f32 %v344
    %vm352 = vweird.f32 %v346
    %vm353 = vmor %vm351, %vm352
    %v354 = vsel %vm353, %v346, %v350
    %v355 = vand.u32 2147483647, %v344
    %vm356 = vcmp.eq.f32.partialorder %v355, 8.507059e+37
    %v357 = vand.u32 %v344, 2147483648
    %v358 = vor.u32 1.1754944e-38, %v357
    %v359 = vsel %vm356, %v358, %v354
    %v360 = vmul.f32 1.0, %v359
    %v361 = vrcp.pop %v345
    %v362 = vmul.f32 %v345, %v361
    %v363 = vsub.f32 1.0, %v362
    %v364 = vmul.f32 %v361, %v363
    %v365 = vadd.f32 %v361, %v364
    %vm366 = vweird.f32 %v345
    %vm367 = vweird.f32 %v361
    %vm368 = vmor %vm366, %vm367
    %v369 = vsel %vm368, %v361, %v365
    %v370 = vand.u32 2147483647, %v345
    %vm371 = vcmp.eq.f32.partialorder %v370, 8.507059e+37
    %v372 = vand.u32 %v345, 2147483648
    %v373 = vor.u32 1.1754944e-38, %v372
    %v374 = vsel %vm371, %v373, %v369
    %v375 = vmul.f32 1.0, %v374
    %v376 = vtanh.pop %v337
    %378 = vrot.lane.b32.xlu0 %v262, 64
    %v379 = vpop.permute.xlu0 %378
    %v381 = vmul.f32 %v360, %v379
    %383 = vrot.lane.b32.xlu0 %v376, 64
    %v384 = vpop.permute.xlu0 %383
    %v386 = vmul.f32 %v360, %v384
    %388 = vrot.lane.b32.xlu0 %v386, 64
    %v389 = vpop.permute.xlu0 %388
    %v391 = vadd.f32 %v381, %v389
    %v392 = vtanh.pop %v391
    %394 = vrot.lane.b32.xlu0 %v392, 64
    %v395 = vpop.permute.xlu0 %394
    %v397 = vmul.f32 %v375, %v395
    %v398 = vpack.c.bf16 %v397, %v397
    %v400 = vsel %vm306, %v398, 0
    %402 = vmatpush.bf16.msra.mxu0 0
    %403 = vmatpush.bf16.msra.mxu0 0
    %404 = vmatpush.bf16.msra.mxu0 0
    %405 = vmatpush.bf16.msra.mxu0 0
    %406 = vmatpush.bf16.msra.mxu0 %v296
    %407 = vmatpush.bf16.msra.mxu0 %v294
    %408 = vmatpush.bf16.msra.mxu0 %v292
    %409 = vmatpush.bf16.msra.mxu0 %v290
    %410 = vmatmul.bf16.gmra.mxu0 %v400
    %v411 = vpop.f32.mrf.mxu0
    %v412 = vadd.f32 0.0, %v411
    %v413 = vpop.f32.mrf.mxu0
    %414 = vdwg.mxu0
    %415 = vmatpush.bf16.msra.mxu0 0
    %416 = vmatpush.bf16.msra.mxu0 0
    %417 = vmatpush.bf16.msra.mxu0 0
    %418 = vmatpush.bf16.msra.mxu0 0
    %419 = vmatpush.bf16.msra.mxu0 %v297
    %420 = vmatpush.bf16.msra.mxu0 %v295
    %421 = vmatpush.bf16.msra.mxu0 %v293
    %422 = vmatpush.bf16.msra.mxu0 %v291
    %423 = vmatmul.bf16.gmra.mxu0 %v400
    %v424 = vpop.f32.mrf.mxu0
    %v425 = vadd.f32 0.0, %v424
    %v426 = vpop.f32.mrf.mxu0
    %427 = vdwg.mxu0
    %v428 = vadd.f32 %v176, %v412
    %v429 = vadd.f32 %v205, %v425
    %v430 = vxor.u32 %v428, 2147483648
    %v431 = vxor.u32 %v429, 2147483648
    %v432 = vmul.f32 %v430, 1.442695
    %v433 = vpow.pop %v432
    %v434 = vmul.f32 %v431, 1.442695
    %v435 = vpow.pop %v434
    %v436 = vadd.f32 %v433, 1.0
    %v437 = vadd.f32 %v435, 1.0
    %v438 = vrcp.pop %v436
    %v439 = vmul.f32 %v436, %v438
    %v440 = vsub.f32 1.0, %v439
    %v441 = vmul.f32 %v438, %v440
    %v442 = vadd.f32 %v438, %v441
    %vm443 = vweird.f32 %v436
    %vm444 = vweird.f32 %v438
    %vm445 = vmor %vm443, %vm444
    %v446 = vsel %vm445, %v438, %v442
    %v447 = vand.u32 2147483647, %v436
    %vm448 = vcmp.eq.f32.partialorder %v447, 8.507059e+37
    %v449 = vand.u32 %v436, 2147483648
    %v450 = vor.u32 1.1754944e-38, %v449
    %v451 = vsel %vm448, %v450, %v446
    %v452 = vmul.f32 1.0, %v451
    %v453 = vrcp.pop %v437
    %v454 = vmul.f32 %v437, %v453
    %v455 = vsub.f32 1.0, %v454
    %v456 = vmul.f32 %v453, %v455
    %v457 = vadd.f32 %v453, %v456
    %vm458 = vweird.f32 %v437
    %vm459 = vweird.f32 %v453
    %vm460 = vmor %vm458, %vm459
    %v461 = vsel %vm460, %v453, %v457
    %v462 = vand.u32 2147483647, %v437
    %vm463 = vcmp.eq.f32.partialorder %v462, 8.507059e+37
    %v464 = vand.u32 %v437, 2147483648
    %v465 = vor.u32 1.1754944e-38, %v464
    %v466 = vsel %vm463, %v465, %v461
    %v467 = vmul.f32 1.0, %v466
    %v468 = vtanh.pop %v429
    %v469 = vmul.f32 %v452, %v391
    %471 = vrot.lane.b32.xlu0 %v468, 64
    %v472 = vpop.permute.xlu0 %471
    %v474 = vmul.f32 %v452, %v472
    %476 = vrot.lane.b32.xlu0 %v474, 64
    %v477 = vpop.permute.xlu0 %476
    %v479 = vadd.f32 %v469, %v477
    %v480 = vtanh.pop %v479
    %482 = vrot.lane.b32.xlu0 %v480, 64
    %v483 = vpop.permute.xlu0 %482
    %v485 = vmul.f32 %v467, %v483
    %v486 = vpack.c.bf16 %v485, %v485
    %v488 = vsel %vm306, %v486, 0
    %490 = vmatpush.bf16.msra.mxu0 0
    %491 = vmatpush.bf16.msra.mxu0 0
    %492 = vmatpush.bf16.msra.mxu0 0
    %493 = vmatpush.bf16.msra.mxu0 0
    %494 = vmatpush.bf16.msra.mxu0 %v296
    %495 = vmatpush.bf16.msra.mxu0 %v294
    %496 = vmatpush.bf16.msra.mxu0 %v292
    %497 = vmatpush.bf16.msra.mxu0 %v290
    %498 = vmatmul.bf16.gmra.mxu0 %v488
    %v499 = vpop.f32.mrf.mxu0
    %v500 = vadd.f32 0.0, %v499
    %v501 = vpop.f32.mrf.mxu0
    %502 = vdwg.mxu0
    %503 = vmatpush.bf16.msra.mxu0 0
    %504 = vmatpush.bf16.msra.mxu0 0
    %505 = vmatpush.bf16.msra.mxu0 0
    %506 = vmatpush.bf16.msra.mxu0 0
    %507 = vmatpush.bf16.msra.mxu0 %v297
    %508 = vmatpush.bf16.msra.mxu0 %v295
    %509 = vmatpush.bf16.msra.mxu0 %v293
    %510 = vmatpush.bf16.msra.mxu0 %v291
    %511 = vmatmul.bf16.gmra.mxu0 %v488
    %v512 = vpop.f32.mrf.mxu0
    %v513 = vadd.f32 0.0, %v512
    %v514 = vpop.f32.mrf.mxu0
    %515 = vdwg.mxu0
    %v516 = vadd.f32 %v178, %v500
    %v517 = vadd.f32 %v207, %v513
    %v518 = vxor.u32 %v516, 2147483648
    %v519 = vxor.u32 %v517, 2147483648
    %v520 = vmul.f32 %v518, 1.442695
    %v521 = vpow.pop %v520
    %v522 = vmul.f32 %v519, 1.442695
    %v523 = vpow.pop %v522
    %v524 = vadd.f32 %v521, 1.0
    %v525 = vadd.f32 %v523, 1.0
    %v526 = vrcp.pop %v524
    %v527 = vmul.f32 %v524, %v526
    %v528 = vsub.f32 1.0, %v527
    %v529 = vmul.f32 %v526, %v528
    %v530 = vadd.f32 %v526, %v529
    %vm531 = vweird.f32 %v524
    %vm532 = vweird.f32 %v526
    %vm533 = vmor %vm531, %vm532
    %v534 = vsel %vm533, %v526, %v530
    %v535 = vand.u32 2147483647, %v524
    %vm536 = vcmp.eq.f32.partialorder %v535, 8.507059e+37
    %v537 = vand.u32 %v524, 2147483648
    %v538 = vor.u32 1.1754944e-38, %v537
    %v539 = vsel %vm536, %v538, %v534
    %v540 = vmul.f32 1.0, %v539
    %v541 = vrcp.pop %v525
    %v542 = vmul.f32 %v525, %v541
    %v543 = vsub.f32 1.0, %v542
    %v544 = vmul.f32 %v541, %v543
    %v545 = vadd.f32 %v541, %v544
    %vm546 = vweird.f32 %v525
    %vm547 = vweird.f32 %v541
    %vm548 = vmor %vm546, %vm547
    %v549 = vsel %vm548, %v541, %v545
    %v550 = vand.u32 2147483647, %v525
    %vm551 = vcmp.eq.f32.partialorder %v550, 8.507059e+37
    %v552 = vand.u32 %v525, 2147483648
    %v553 = vor.u32 1.1754944e-38, %v552
    %v554 = vsel %vm551, %v553, %v549
    %v555 = vmul.f32 1.0, %v554
    %v556 = vtanh.pop %v517
    %v557 = vmul.f32 %v540, %v479
    %559 = vrot.lane.b32.xlu0 %v556, 64
    %v560 = vpop.permute.xlu0 %559
    %v562 = vmul.f32 %v540, %v560
    %564 = vrot.lane.b32.xlu0 %v562, 64
    %v565 = vpop.permute.xlu0 %564
    %v567 = vadd.f32 %v557, %v565
    %v568 = vtanh.pop %v567
    %570 = vrot.lane.b32.xlu0 %v568, 64
    %v571 = vpop.permute.xlu0 %570
    %v573 = vmul.f32 %v555, %v571
    %v574 = vpack.c.bf16 %v573, %v573
    %v576 = vsel %vm306, %v574, 0
    %578 = vmatpush.bf16.msra.mxu0 0
    %579 = vmatpush.bf16.msra.mxu0 0
    %580 = vmatpush.bf16.msra.mxu0 0
    %581 = vmatpush.bf16.msra.mxu0 0
    %582 = vmatpush.bf16.msra.mxu0 %v296
    %583 = vmatpush.bf16.msra.mxu0 %v294
    %584 = vmatpush.bf16.msra.mxu0 %v292
    %585 = vmatpush.bf16.msra.mxu0 %v290
    %586 = vmatmul.bf16.gmra.mxu0 %v576
    %v587 = vpop.f32.mrf.mxu0
    %v588 = vadd.f32 0.0, %v587
    %v589 = vpop.f32.mrf.mxu0
    %590 = vdwg.mxu0
    %591 = vmatpush.bf16.msra.mxu0 0
    %592 = vmatpush.bf16.msra.mxu0 0
    %593 = vmatpush.bf16.msra.mxu0 0
    %594 = vmatpush.bf16.msra.mxu0 0
    %595 = vmatpush.bf16.msra.mxu0 %v297
    %596 = vmatpush.bf16.msra.mxu0 %v295
    %597 = vmatpush.bf16.msra.mxu0 %v293
    %598 = vmatpush.bf16.msra.mxu0 %v291
    %599 = vmatmul.bf16.gmra.mxu0 %v576
    %v600 = vpop.f32.mrf.mxu0
    %v601 = vadd.f32 0.0, %v600
    %v602 = vpop.f32.mrf.mxu0
    %603 = vdwg.mxu0
    %v604 = vadd.f32 %v181, %v588
    %v605 = vadd.f32 %v210, %v601
    %v606 = vxor.u32 %v604, 2147483648
    %v607 = vxor.u32 %v605, 2147483648
    %v608 = vmul.f32 %v606, 1.442695
    %v609 = vpow.pop %v608
    %v610 = vmul.f32 %v607, 1.442695
    %v611 = vpow.pop %v610
    %v612 = vadd.f32 %v609, 1.0
    %v613 = vadd.f32 %v611, 1.0
    %v614 = vrcp.pop %v612
    %v615 = vmul.f32 %v612, %v614
    %v616 = vsub.f32 1.0, %v615
    %v617 = vmul.f32 %v614, %v616
    %v618 = vadd.f32 %v614, %v617
    %vm619 = vweird.f32 %v612
    %vm620 = vweird.f32 %v614
    %vm621 = vmor %vm619, %vm620
    %v622 = vsel %vm621, %v614, %v618
    %v623 = vand.u32 2147483647, %v612
    %vm624 = vcmp.eq.f32.partialorder %v623, 8.507059e+37
    %v625 = vand.u32 %v612, 2147483648
    %v626 = vor.u32 1.1754944e-38, %v625
    %v627 = vsel %vm624, %v626, %v622
    %v628 = vmul.f32 1.0, %v627
    %v629 = vrcp.pop %v613
    %v630 = vmul.f32 %v613, %v629
    %v631 = vsub.f32 1.0, %v630
    %v632 = vmul.f32 %v629, %v631
    %v633 = vadd.f32 %v629, %v632
    %vm634 = vweird.f32 %v613
    %vm635 = vweird.f32 %v629
    %vm636 = vmor %vm634, %vm635
    %v637 = vsel %vm636, %v629, %v633
    %v638 = vand.u32 2147483647, %v613
    %vm639 = vcmp.eq.f32.partialorder %v638, 8.507059e+37
    %v640 = vand.u32 %v613, 2147483648
    %v641 = vor.u32 1.1754944e-38, %v640
    %v642 = vsel %vm639, %v641, %v637
    %v643 = vmul.f32 1.0, %v642
    %v644 = vtanh.pop %v605
    %v645 = vmul.f32 %v628, %v567
    %647 = vrot.lane.b32.xlu0 %v644, 64
    %v648 = vpop.permute.xlu0 %647
    %v650 = vmul.f32 %v628, %v648
    %652 = vrot.lane.b32.xlu0 %v650, 64
    %v653 = vpop.permute.xlu0 %652
    %v655 = vadd.f32 %v645, %v653
    %v656 = vtanh.pop %v655
    %658 = vrot.lane.b32.xlu0 %v656, 64
    %v659 = vpop.permute.xlu0 %658
    %v661 = vmul.f32 %v643, %v659
    %v662 = vpack.c.bf16 %v661, %v661
    %v664 = vsel %vm306, %v662, 0
    %666 = vmatpush.bf16.msra.mxu0 0
    %667 = vmatpush.bf16.msra.mxu0 0
    %668 = vmatpush.bf16.msra.mxu0 0
    %669 = vmatpush.bf16.msra.mxu0 0
    %670 = vmatpush.bf16.msra.mxu0 %v296
    %671 = vmatpush.bf16.msra.mxu0 %v294
    %672 = vmatpush.bf16.msra.mxu0 %v292
    %673 = vmatpush.bf16.msra.mxu0 %v290
    %674 = vmatmul.bf16.gmra.mxu0 %v664
    %v675 = vpop.f32.mrf.mxu0
    %v676 = vadd.f32 0.0, %v675
    %v677 = vpop.f32.mrf.mxu0
    %678 = vdwg.mxu0
    %679 = vmatpush.bf16.msra.mxu0 0
    %680 = vmatpush.bf16.msra.mxu0 0
    %681 = vmatpush.bf16.msra.mxu0 0
    %682 = vmatpush.bf16.msra.mxu0 0
    %683 = vmatpush.bf16.msra.mxu0 %v297
    %684 = vmatpush.bf16.msra.mxu0 %v295
    %685 = vmatpush.bf16.msra.mxu0 %v293
    %686 = vmatpush.bf16.msra.mxu0 %v291
    %687 = vmatmul.bf16.gmra.mxu0 %v664
    %v688 = vpop.f32.mrf.mxu0
    %v689 = vadd.f32 0.0, %v688
    %v690 = vpop.f32.mrf.mxu0
    %691 = vdwg.mxu0
    %v692 = vadd.f32 %v183, %v676
    %v693 = vadd.f32 %v212, %v689
    %v694 = vxor.u32 %v692, 2147483648
    %v695 = vxor.u32 %v693, 2147483648
    %v696 = vmul.f32 %v694, 1.442695
    %v697 = vpow.pop %v696
    %v698 = vmul.f32 %v695, 1.442695
    %v699 = vpow.pop %v698
    %v700 = vadd.f32 %v697, 1.0
    %v701 = vadd.f32 %v699, 1.0
    %v702 = vrcp.pop %v700
    %v703 = vmul.f32 %v700, %v702
    %v704 = vsub.f32 1.0, %v703
    %v705 = vmul.f32 %v702, %v704
    %v706 = vadd.f32 %v702, %v705
    %vm707 = vweird.f32 %v700
    %vm708 = vweird.f32 %v702
    %vm709 = vmor %vm707, %vm708
    %v710 = vsel %vm709, %v702, %v706
    %v711 = vand.u32 2147483647, %v700
    %vm712 = vcmp.eq.f32.partialorder %v711, 8.507059e+37
    %v713 = vand.u32 %v700, 2147483648
    %v714 = vor.u32 1.1754944e-38, %v713
    %v715 = vsel %vm712, %v714, %v710
    %v716 = vmul.f32 1.0, %v715
    %v717 = vrcp.pop %v701
    %v718 = vmul.f32 %v701, %v717
    %v719 = vsub.f32 1.0, %v718
    %v720 = vmul.f32 %v717, %v719
    %v721 = vadd.f32 %v717, %v720
    %vm722 = vweird.f32 %v701
    %vm723 = vweird.f32 %v717
    %vm724 = vmor %vm722, %vm723
    %v725 = vsel %vm724, %v717, %v721
    %v726 = vand.u32 2147483647, %v701
    %vm727 = vcmp.eq.f32.partialorder %v726, 8.507059e+37
    %v728 = vand.u32 %v701, 2147483648
    %v729 = vor.u32 1.1754944e-38, %v728
    %v730 = vsel %vm727, %v729, %v725
    %v731 = vmul.f32 1.0, %v730
    %v732 = vtanh.pop %v693
    %v733 = vmul.f32 %v716, %v655
    %735 = vrot.lane.b32.xlu0 %v732, 64
    %v736 = vpop.permute.xlu0 %735
    %v738 = vmul.f32 %v716, %v736
    %740 = vrot.lane.b32.xlu0 %v738, 64
    %v741 = vpop.permute.xlu0 %740
    %v743 = vadd.f32 %v733, %v741
    %v744 = vtanh.pop %v743
    %746 = vrot.lane.b32.xlu0 %v744, 64
    %v747 = vpop.permute.xlu0 %746
    %v749 = vmul.f32 %v731, %v747
    %v750 = vpack.c.bf16 %v749, %v749
    %v752 = vsel %vm306, %v750, 0
    %754 = vmatpush.bf16.msra.mxu0 0
    %755 = vmatpush.bf16.msra.mxu0 0
    %756 = vmatpush.bf16.msra.mxu0 0
    %757 = vmatpush.bf16.msra.mxu0 0
    %758 = vmatpush.bf16.msra.mxu0 %v296
    %759 = vmatpush.bf16.msra.mxu0 %v294
    %760 = vmatpush.bf16.msra.mxu0 %v292
    %761 = vmatpush.bf16.msra.mxu0 %v290
    %762 = vmatmul.bf16.gmra.mxu0 %v752
    %v763 = vpop.f32.mrf.mxu0
    %v764 = vadd.f32 0.0, %v763
    %v765 = vpop.f32.mrf.mxu0
    %766 = vdwg.mxu0
    %767 = vmatpush.bf16.msra.mxu0 0
    %768 = vmatpush.bf16.msra.mxu0 0
    %769 = vmatpush.bf16.msra.mxu0 0
    %770 = vmatpush.bf16.msra.mxu0 0
    %771 = vmatpush.bf16.msra.mxu0 %v297
    %772 = vmatpush.bf16.msra.mxu0 %v295
    %773 = vmatpush.bf16.msra.mxu0 %v293
    %774 = vmatpush.bf16.msra.mxu0 %v291
    %775 = vmatmul.bf16.gmra.mxu0 %v752
    %v776 = vpop.f32.mrf.mxu0
    %v777 = vadd.f32 0.0, %v776
    %v778 = vpop.f32.mrf.mxu0
    %779 = vdwg.mxu0
    %v780 = vadd.f32 %v186, %v764
    %v781 = vadd.f32 %v215, %v777
    %v782 = vxor.u32 %v780, 2147483648
    %v783 = vxor.u32 %v781, 2147483648
    %v784 = vmul.f32 %v782, 1.442695
    %v785 = vpow.pop %v784
    %v786 = vmul.f32 %v783, 1.442695
    %v787 = vpow.pop %v786
    %v788 = vadd.f32 %v785, 1.0
    %v789 = vadd.f32 %v787, 1.0
    %v790 = vrcp.pop %v788
    %v791 = vmul.f32 %v788, %v790
    %v792 = vsub.f32 1.0, %v791
    %v793 = vmul.f32 %v790, %v792
    %v794 = vadd.f32 %v790, %v793
    %vm795 = vweird.f32 %v788
    %vm796 = vweird.f32 %v790
    %vm797 = vmor %vm795, %vm796
    %v798 = vsel %vm797, %v790, %v794
    %v799 = vand.u32 2147483647, %v788
    %vm800 = vcmp.eq.f32.partialorder %v799, 8.507059e+37
    %v801 = vand.u32 %v788, 2147483648
    %v802 = vor.u32 1.1754944e-38, %v801
    %v803 = vsel %vm800, %v802, %v798
    %v804 = vmul.f32 1.0, %v803
    %v805 = vrcp.pop %v789
    %v806 = vmul.f32 %v789, %v805
    %v807 = vsub.f32 1.0, %v806
    %v808 = vmul.f32 %v805, %v807
    %v809 = vadd.f32 %v805, %v808
    %vm810 = vweird.f32 %v789
    %vm811 = vweird.f32 %v805
    %vm812 = vmor %vm810, %vm811
    %v813 = vsel %vm812, %v805, %v809
    %v814 = vand.u32 2147483647, %v789
    %vm815 = vcmp.eq.f32.partialorder %v814, 8.507059e+37
    %v816 = vand.u32 %v789, 2147483648
    %v817 = vor.u32 1.1754944e-38, %v816
    %v818 = vsel %vm815, %v817, %v813
    %v819 = vmul.f32 1.0, %v818
    %v820 = vtanh.pop %v781
    %v821 = vmul.f32 %v804, %v743
    %823 = vrot.lane.b32.xlu0 %v820, 64
    %v824 = vpop.permute.xlu0 %823
    %v826 = vmul.f32 %v804, %v824
    %828 = vrot.lane.b32.xlu0 %v826, 64
    %v829 = vpop.permute.xlu0 %828
    %v831 = vadd.f32 %v821, %v829
    %v832 = vtanh.pop %v831
    %834 = vrot.lane.b32.xlu0 %v832, 64
    %v835 = vpop.permute.xlu0 %834
    %v837 = vmul.f32 %v819, %v835
    %v838 = vpack.c.bf16 %v837, %v837
    %v840 = vsel %vm306, %v838, 0
    %842 = vmatpush.bf16.msra.mxu0 0
    %843 = vmatpush.bf16.msra.mxu0 0
    %844 = vmatpush.bf16.msra.mxu0 0
    %845 = vmatpush.bf16.msra.mxu0 0
    %846 = vmatpush.bf16.msra.mxu0 %v296
    %847 = vmatpush.bf16.msra.mxu0 %v294
    %848 = vmatpush.bf16.msra.mxu0 %v292
    %849 = vmatpush.bf16.msra.mxu0 %v290
    %850 = vmatmul.bf16.gmra.mxu0 %v840
    %v851 = vpop.f32.mrf.mxu0
    %v852 = vadd.f32 0.0, %v851
    %v853 = vpop.f32.mrf.mxu0
    %854 = vdwg.mxu0
    %855 = vmatpush.bf16.msra.mxu0 0
    %856 = vmatpush.bf16.msra.mxu0 0
    %857 = vmatpush.bf16.msra.mxu0 0
    %858 = vmatpush.bf16.msra.mxu0 0
    %859 = vmatpush.bf16.msra.mxu0 %v297
    %860 = vmatpush.bf16.msra.mxu0 %v295
    %861 = vmatpush.bf16.msra.mxu0 %v293
    %862 = vmatpush.bf16.msra.mxu0 %v291
    %863 = vmatmul.bf16.gmra.mxu0 %v840
    %v864 = vpop.f32.mrf.mxu0
    %v865 = vadd.f32 0.0, %v864
    %v866 = vpop.f32.mrf.mxu0
    %867 = vdwg.mxu0
    %v868 = vadd.f32 %v188, %v852
    %v869 = vadd.f32 %v217, %v865
    %v870 = vxor.u32 %v868, 2147483648
    %v871 = vxor.u32 %v869, 2147483648
    %v872 = vmul.f32 %v870, 1.442695
    %v873 = vpow.pop %v872
    %v874 = vmul.f32 %v871, 1.442695
    %v875 = vpow.pop %v874
    %v876 = vadd.f32 %v873, 1.0
    %v877 = vadd.f32 %v875, 1.0
    %v878 = vrcp.pop %v876
    %v879 = vmul.f32 %v876, %v878
    %v880 = vsub.f32 1.0, %v879
    %v881 = vmul.f32 %v878, %v880
    %v882 = vadd.f32 %v878, %v881
    %vm883 = vweird.f32 %v876
    %vm884 = vweird.f32 %v878
    %vm885 = vmor %vm883, %vm884
    %v886 = vsel %vm885, %v878, %v882
    %v887 = vand.u32 2147483647, %v876
    %vm888 = vcmp.eq.f32.partialorder %v887, 8.507059e+37
    %v889 = vand.u32 %v876, 2147483648
    %v890 = vor.u32 1.1754944e-38, %v889
    %v891 = vsel %vm888, %v890, %v886
    %v892 = vmul.f32 1.0, %v891
    %v893 = vrcp.pop %v877
    %v894 = vmul.f32 %v877, %v893
    %v895 = vsub.f32 1.0, %v894
    %v896 = vmul.f32 %v893, %v895
    %v897 = vadd.f32 %v893, %v896
    %vm898 = vweird.f32 %v877
    %vm899 = vweird.f32 %v893
    %vm900 = vmor %vm898, %vm899
    %v901 = vsel %vm900, %v893, %v897
    %v902 = vand.u32 2147483647, %v877
    %vm903 = vcmp.eq.f32.partialorder %v902, 8.507059e+37
    %v904 = vand.u32 %v877, 2147483648
    %v905 = vor.u32 1.1754944e-38, %v904
    %v906 = vsel %vm903, %v905, %v901
    %v907 = vmul.f32 1.0, %v906
    %v908 = vtanh.pop %v869
    %v909 = vmul.f32 %v892, %v831
    %911 = vrot.lane.b32.xlu0 %v908, 64
    %v912 = vpop.permute.xlu0 %911
    %v914 = vmul.f32 %v892, %v912
    %916 = vrot.lane.b32.xlu0 %v914, 64
    %v917 = vpop.permute.xlu0 %916
    %v919 = vadd.f32 %v909, %v917
    %v920 = vtanh.pop %v919
    %922 = vrot.lane.b32.xlu0 %v920, 64
    %v923 = vpop.permute.xlu0 %922
    %v925 = vmul.f32 %v907, %v923
    %v926 = vpack.c.bf16 %v925, %v925
    %v927 = vld [vmem:[#allocation5] sm:$0xf]
    %v928 = vld [vmem:[#allocation5 + $0x4] sm:$0xf]
    %v929 = vld [vmem:[#allocation5 + $0x8] sm:$0xf]
    %v930 = vld [vmem:[#allocation5 + $0xc] sm:$0xf]
    %v931 = vld [vmem:[#allocation5 + $0x10] sm:$0xf]
    %v932 = vld [vmem:[#allocation5 + $0x14] sm:$0xf]
    %v933 = vld [vmem:[#allocation5 + $0x18] sm:$0xf]
    %v934 = vld [vmem:[#allocation5 + $0x1c] sm:$0xf]
    %v935 = vld [vmem:[%s5] sm:$0x1]
    %v937 = vperm.slane %v935, 0
    %v947 = vunpack.c.l.b16 %v927
    %v948 = vunpack.c.l.b16 %v928
    %v949 = vunpack.c.l.b16 %v929
    %v950 = vunpack.c.l.b16 %v930
    %v951 = vunpack.c.l.b16 %v931
    %v952 = vunpack.c.l.b16 %v932
    %v953 = vunpack.c.l.b16 %v933
    %v954 = vunpack.c.l.b16 %v934
    %v955 = vpack.c.b16 %v948, %v947
    %v956 = vpack.c.b16 %v950, %v949
    %v957 = vpack.c.b16 %v952, %v951
    %v958 = vpack.c.b16 %v954, %v953
    %v964 = vsel %vm306, %v926, 0
    %966 = vmatpush.bf16.msra.mxu0 0
    %967 = vmatpush.bf16.msra.mxu0 0
    %968 = vmatpush.bf16.msra.mxu0 0
    %969 = vmatpush.bf16.msra.mxu0 0
    %970 = vmatpush.bf16.msra.mxu0 %v958
    %971 = vmatpush.bf16.msra.mxu0 %v957
    %972 = vmatpush.bf16.msra.mxu0 %v956
    %973 = vmatpush.bf16.msra.mxu0 %v955
    %974 = vmatmul.bf16.gmra.mxu0 %v964
    %v975 = vpop.f32.mrf.mxu0
    %v976 = vadd.f32 %v937, %v975
    %v977 = vpop.f32.mrf.mxu0
    %978 = vdwg.mxu0
    %979 = vst [vmem:[#allocation7] sm:$0xff] %v976
    // Predicated region
    $region34: #{tpu_custom_call.1} parent=1 // pred_check
      _
    $region35: #{tpu_custom_call.1} parent=1 // pred_check_branch
      %981 = sbr.rel (0) target = $region37
    $region36: #{tpu_custom_call.1} parent=1 // pred_region
      %983 = vsyncadd [#allocation4], 0
      %s985 = sshll.u32 [#allocation7], 4
      %s986 = int_to_ptr.vmem [resolvable:$true] %s985
      %s987 = sshll.u32 %s6, 4
      %s988 = int_to_ptr.hbm [resolvable:$true] %s987
      %990 = dma.vmem_to_hbm [thread:$0]  %s986, 128, %s988, [#allocation4]
    $region37: #{tpu_custom_call.1} parent=1 // pred_fallthru
      _
    // Predicated region
    $region38: #{tpu_custom_call.1} parent=1 // pred_check
      _
    $region39: #{tpu_custom_call.1} parent=1 // pred_check_branch
      %992 = sbr.rel (0) target = $region41
    $region40: #{tpu_custom_call.1} parent=1 // pred_region
      %994 = dma.done [#allocation4], 128
    $region41: #{tpu_custom_call.1} parent=1 // pred_fallthru
      _
    %995 = vsyncpa [#allocation3], 1
    %996 = vsyncpa [#allocation6], 1
    %997 = vsyncpa [#allocation4], 1

</llo_original>
